<compile_context>
chip_gen: v7x
topology: tpu7x:2x2x1
jax: 0.10.0
libtpu: 0.0.40
codegen_flags: <defaults>
</compile_context>

<pallas_src>
import functools

import jax
import jax.numpy as jnp
from jax.experimental import pallas as pl
from jax.experimental.pallas import tpu as pltpu


def _largest_divisor_tile(dim: int, unit: int, cap: int) -> int:
    """Largest multiple of `unit` that divides `dim` and is <= cap (else `dim`)."""
    best = 0
    top = min(dim, max(unit, cap))
    for cand in range(unit, top + 1, unit):
        if dim % cand == 0:
            best = cand
    return best if best > 0 else dim


def _moving_avg_kernel(x_ref, o_ref, halo_ref, *, k: int, halo_pad: int,
                       num_time_blocks: int):
    """One (batch, channel-tile, time-tile) grid step.

    x_ref   : (TL, TC) input tile  -- time on sublanes, channels on lanes
    o_ref   : (TL, TC) output tile
    halo_ref: (halo_pad, TC) scratch carrying the trailing time rows of the
              previous time tile (only used when the time axis is tiled).
    """
    tl, tc = x_ref.shape

    if k == 1:                                    # static: identity
        o_ref[...] = x_ref[...]
        return

    if num_time_blocks == 1:
        # Replicate-first-timestep front padding, fully in-register.
        front = jnp.broadcast_to(x_ref[0:1, :], (halo_pad, tc))
    else:
        l = pl.program_id(2)

        @pl.when(l == 0)
        def _():
            halo_ref[...] = jnp.broadcast_to(x_ref[0:1, :], (halo_pad, tc))

        front = halo_ref[...]                     # history from the previous tile

    # Window of the (k-1) preceding rows (last k-1 rows of `front`) + this tile.
    w = jnp.concatenate([front, x_ref[...]], axis=0)        # (halo_pad + TL, TC)

    # Sliding-window sum of length k via binary doubling:
    #   ~floor(log2 k) doubling adds + (popcount(k)-1) combine adds,
    # instead of k shifted adds.  fp32 accumulation; the .astype is a no-op for
    # f32 inputs and avoids a full-width fp32 window temp for bf16 inputs.
    acc = None
    cur = w
    cur_len = halo_pad + tl
    offset = halo_pad - (k - 1)
    run, rem = 1, k
    while True:
        if rem & 1:
            part = cur[offset:offset + tl, :].astype(jnp.float32)
            acc = part if acc is None else acc + part
            offset += run
        rem >>= 1
        if rem == 0:
            break
        lo = cur[0:cur_len - run, :].astype(jnp.float32)
        hi = cur[run:cur_len, :].astype(jnp.float32)
        cur = lo + hi                              # run-length doubled partial sums
        cur_len -= run
        run *= 2

    o_ref[...] = (acc * (1.0 / k)).astype(o_ref.dtype)

    if num_time_blocks > 1:
        # Carry the trailing rows as history; skip the dead store on the last tile.
        @pl.when(l + 1 < pl.num_programs(2))
        def _():
            halo_ref[...] = x_ref[tl - halo_pad:, :]


def moving_avg(x: jax.Array, kernel_size: int, *,
               time_block=None, channel_block=None) -> jax.Array:
    """x: [B, L, C] -> [B, L, C] trailing moving average with replicate-front padding."""
    if x.ndim != 3:
        raise ValueError(f"expected [B, L, C], got shape {x.shape}")
    k = int(kernel_size)
    if k < 1:
        raise ValueError("kernel_size must be >= 1")
    B, L, C = x.shape
    itemsize = jnp.dtype(x.dtype).itemsize

    # Sublane packing unit for this dtype (8 rows for f32, 16 for bf16, 32 for i8).
    sub = max(8, 32 // itemsize)
    # History rows needed before each time tile, rounded up to the packing unit.
    halo_pad = max(sub, (-(-(k - 1) // sub)) * sub)

    # Channel (lane) tile: multiple of 128 when possible, else the full C.
    if channel_block is None:
        channel_block = _largest_divisor_tile(C, 128, 512) if C % 128 == 0 else C
    if (channel_block != C and channel_block % 128 != 0) or C % channel_block:
        raise ValueError("channel_block must divide C and be a multiple of 128 (or equal C)")

    # Time (sublane) tile: multiple of the packing unit, ~2 MiB input blocks.
    if time_block is None:
        cap = max(sub, (2 * 1024 * 1024) // max(1, channel_block * itemsize))
        tb = _largest_divisor_tile(L, sub, cap)
        if L % tb != 0 or (L // tb > 1 and halo_pad > tb):
            # TODO(synk): pad ragged L up to a sublane multiple instead of one big tile.
            tb = L
        time_block = tb
    if L % time_block:
        raise ValueError("time_block must divide L")
    num_l = L // time_block
    num_c = C // channel_block
    if num_l > 1:
        if time_block % sub:
            raise ValueError("tiled time_block must be a multiple of the sublane packing")
        if halo_pad > time_block:
            raise ValueError("kernel_size - 1 must fit within one time tile when time is tiled")
    # TODO(synk): when B * num_c < 2 on v7x, split the time axis per core
    # (overlapping halo reads) so both TensorCores get work.

    kernel = functools.partial(_moving_avg_kernel, k=k, halo_pad=halo_pad,
                               num_time_blocks=num_l)

    return pl.pallas_call(
        kernel,
        out_shape=jax.ShapeDtypeStruct((B, L, C), x.dtype),
        grid_spec=pltpu.PrefetchScalarGridSpec(
            num_scalar_prefetch=0,
            grid=(B, num_c, num_l),              # sequential (carry) time axis last
            in_specs=[pl.BlockSpec((None, time_block, channel_block),
                                   lambda b, c, l: (b, l, c))],
            out_specs=pl.BlockSpec((None, time_block, channel_block),
                                   lambda b, c, l: (b, l, c)),
            scratch_shapes=[pltpu.VMEM((halo_pad, channel_block), x.dtype)],
        ),
        compiler_params=pltpu.CompilerParams(
            dimension_semantics=("parallel", "parallel", "arbitrary"),
            vmem_limit_bytes=40 * 1024 * 1024,   # safe on v5e/v6e (128 MiB) and v7x (64 MiB)
        ),
    )(x)


def moving_avg_ref(x: jax.Array, kernel_size: int) -> jax.Array:
    """Pure-JAX reference mirroring the PyTorch forward."""
    k = kernel_size
    front = jnp.repeat(x[:, 0:1, :], k - 1, axis=1)
    xp = jnp.concatenate([front, x], axis=1).astype(jnp.float32)
    L = x.shape[1]
    windows = jnp.stack([xp[:, j:j + L, :] for j in range(k)], axis=0)
    return jnp.mean(windows, axis=0).astype(x.dtype)


if __name__ == "__main__":
    key = jax.random.PRNGKey(0)
    k1, k2, k3 = jax.random.split(key, 3)

    x_small = jax.random.normal(k1, (2, 256, 8), dtype=jnp.float32)
    x_wide = jax.random.normal(k2, (2, 128, 256), dtype=jnp.float32)
    x_bf16 = jax.random.normal(k3, (2, 128, 8), dtype=jnp.float32).astype(jnp.bfloat16)

    cases = [
        (x_small, 5, {}, 1e-5),
        (x_small, 25, {}, 1e-5),
        (x_small, 25, {"time_block": 128}, 1e-5),           # exercises the carried halo
        (x_wide, 25, {"channel_block": 128}, 1e-5),          # exercises channel tiling
        (x_bf16, 7, {}, 2e-2),                               # bf16 path
    ]
    for xi, k, tile_kwargs, atol in cases:
        fn = jax.jit(functools.partial(moving_avg, kernel_size=k, **tile_kwargs))
        out = jax.block_until_ready(fn(xi))
        ref = moving_avg_ref(xi, k)
        assert out.shape == xi.shape, (out.shape, xi.shape, k, tile_kwargs)
        ok = jnp.allclose(out.astype(jnp.float32), ref.astype(jnp.float32),
                          atol=atol, rtol=1e-3)
        assert ok, f"mismatch vs reference: k={k}, kwargs={tile_kwargs}"

    print("KERNEL_OK")
</pallas_src>

<mosaic_0001>
module attributes {stable_mosaic.version = 11 : i64} {
  func.func @_moving_avg_kernel(%arg0: i32, %arg1: i32, %arg2: i32, %arg3: memref<1x256x8xf32, #tpu.memory_space<vmem>>, %arg4: memref<1x256x8xf32, #tpu.memory_space<vmem>>, %arg5: memref<8x8xf32, #tpu.memory_space<vmem>>) attributes {dimension_semantics = [#tpu.dimension_semantics<parallel>, #tpu.dimension_semantics<parallel>, #tpu.dimension_semantics<arbitrary>], iteration_bounds = array<i64: 2, 1, 1>, scalar_prefetch = 0 : i64, scratch_operands = 1 : i64, tpu.core_type = #tpu.core_type<tc>, window_params = [{transform_indices = @transform_0, window_bounds = array<i64: 1, 256, 8>}, {transform_indices = @transform_1, window_bounds = array<i64: 1, 256, 8>}]} {
    %c0 = arith.constant 0 : index
    %c0_0 = arith.constant 0 : index
    %c0_1 = arith.constant 0 : index
    %0 = vector.load %arg3[%c0, %c0_0, %c0_1] : memref<1x256x8xf32, #tpu.memory_space<vmem>>, vector<1x1x8xf32>
    %1 = vector.shape_cast %0 : vector<1x1x8xf32> to vector<1x8xf32>
    %2 = vector.shape_cast %1 : vector<1x8xf32> to vector<1x8xf32>
    %3 = vector.broadcast %2 : vector<1x8xf32> to vector<8x8xf32>
    %c0_2 = arith.constant 0 : index
    %c0_3 = arith.constant 0 : index
    %c0_4 = arith.constant 0 : index
    %4 = vector.load %arg3[%c0_2, %c0_3, %c0_4] : memref<1x256x8xf32, #tpu.memory_space<vmem>>, vector<1x256x8xf32>
    %5 = vector.shape_cast %4 : vector<1x256x8xf32> to vector<256x8xf32>
    %6 = tpu.concatenate %3, %5 in 0 : vector<8x8xf32>, vector<256x8xf32> -> vector<264x8xf32>
    %7 = vector.extract_strided_slice %6 {offsets = [4, 0], sizes = [256, 8], strides = [1, 1]} : vector<264x8xf32> to vector<256x8xf32>
    %8 = vector.extract_strided_slice %6 {offsets = [0, 0], sizes = [263, 8], strides = [1, 1]} : vector<264x8xf32> to vector<263x8xf32>
    %9 = vector.extract_strided_slice %6 {offsets = [1, 0], sizes = [263, 8], strides = [1, 1]} : vector<264x8xf32> to vector<263x8xf32>
    %10 = arith.addf %8, %9 : vector<263x8xf32>
    %11 = vector.extract_strided_slice %10 {offsets = [0, 0], sizes = [261, 8], strides = [1, 1]} : vector<263x8xf32> to vector<261x8xf32>
    %12 = vector.extract_strided_slice %10 {offsets = [2, 0], sizes = [261, 8], strides = [1, 1]} : vector<263x8xf32> to vector<261x8xf32>
    %13 = arith.addf %11, %12 : vector<261x8xf32>
    %14 = vector.extract_strided_slice %13 {offsets = [5, 0], sizes = [256, 8], strides = [1, 1]} : vector<261x8xf32> to vector<256x8xf32>
    %15 = arith.addf %7, %14 : vector<256x8xf32>
    %cst = arith.constant 2.000000e-01 : f32
    %16 = vector.broadcast %cst : f32 to vector<256x8xf32>
    %17 = arith.mulf %15, %16 : vector<256x8xf32>
    %c0_5 = arith.constant 0 : index
    %c0_6 = arith.constant 0 : index
    %c0_7 = arith.constant 0 : index
    %18 = vector.load %arg4[%c0_5, %c0_6, %c0_7] : memref<1x256x8xf32, #tpu.memory_space<vmem>>, vector<1x256x8xf32>
    %19 = vector.shape_cast %18 : vector<1x256x8xf32> to vector<256x8xf32>
    %20 = vector.shape_cast %17 : vector<256x8xf32> to vector<1x256x8xf32>
    tpu.vector_store %arg4[%c0_5, %c0_6, %c0_7], %20 {strides = array<i32>} : memref<1x256x8xf32, #tpu.memory_space<vmem>>, vector<1x256x8xf32>,
    return
  }
  func.func @transform_0(%arg0: i32, %arg1: i32, %arg2: i32) -> (i32, i32, i32) {
    %c0_i32 = arith.constant 0 : i32
    return %arg0, %arg2, %arg1 : i32, i32, i32
  }
  func.func @transform_1(%arg0: i32, %arg1: i32, %arg2: i32) -> (i32, i32, i32) {
    %c0_i32 = arith.constant 0 : i32
    return %arg0, %arg2, %arg1 : i32, i32, i32
  }
}

</mosaic_0001>

<llo_original>
// kernel: moving_avg.1
$region0: #{moving_avg.1}
  #allocation0 [shape = 'u32[]', space=smem, size = 0x4, offset = 0x4, fixed_abs, tag = 'smem constant byte address 0x4 - core index']
  #allocation1 [shape = 'u32[144,128]{1,0:T(1,128)}', space=vmem, size = 0x12000, scoped, tag = 'internal scratch']
  #allocation2 [shape = 'f32[8,8]{1,0:T(8,128)}', space=vmem, size = 0x1000, scoped, tag = 'scratch operand']
  %s0 = inlined_call_operand.vmem [shape: f32[2,256,8], index: 0, kind: input, shape index: {}]
  %s1 = inlined_call_operand.vmem [shape: f32[2,256,8], index: 1, kind: output, shape index: {}]
  %s2 = sld [smem:[#allocation0]]
  $region37: #{moving_avg.1} parent=0
    _
  %s4 = ssub.s32 1, %s2
  %s5 = scalar_select 0, %s4, %s2
  loop: start=0, step=1, limit=4
  $region2: #{moving_avg.1} parent=0 // loop_pre_header
    _
  $region3: #{moving_avg.1} parent=0 // loop_header
    %s7 = sphi 0, %s11
    %p8 = scmp.ge.s32.totalorder %s7, 4
    %s14 = sphi 0, %s33
    %s15 = sphi 0, %s29
    %s16 = sphi 0, %s25
    %s17 = sphi 0, %s14
    %s18 = sphi 0, %s15
    %s19 = sphi 0, %s16
    %s20 = sphi 0, %s17
    %s21 = sphi 0, %s18
    %s22 = sphi 0, %s19
    %s40 = sphi 0, %s42
    %s43 = sphi 0, %s40
    %s44 = sphi 0, %s43
    %s60 = sphi 0, %s44
    %s70 = sphi 0, %s72
    %s73 = sphi 0, %s70
    %s74 = sphi 0, %s73
    %s90 = sphi 0, %s74
  $region4: #{moving_avg.1} parent=0 // loop_header_branch
    %10 = sbr.rel (%p8) target = $region8
  $region5: #{moving_avg.1} parent=0 // loop_body
    %s12 = ssub.s32 %s7, 1
    %s13 = ssub.s32 %s7, 2
    %s23 = sadd.s32 1, %s16
    %p24 = scmp.ge.s32.totalorder %s23, 1
    %s25 = scalar_select %p24, 0, %s23
    %s26 = sadd.s32 1, %s15
    %s27 = scalar_select %p24, %s26, %s15
    %p28 = scmp.ge.s32.totalorder %s27, 1
    %s29 = scalar_select %p28, 0, %s27
    %s30 = sadd.s32 1, %s14
    %s31 = scalar_select %p28, %s30, %s14
    %p32 = scmp.ge.s32.totalorder %s31, 2
    %s33 = scalar_select %p32, 0, %s31
    %s34 = ssub.s32 %s14, %s33
    %s35 = ssub.s32 %s16, %s25
    %s36 = sor.u32 %s34, %s35
    %s37 = ssub.s32 %s15, %s29
    %s38 = sor.u32 %s36, %s37
    %p39 = scmp.eq.s32.totalorder %s38, 0
    %s41 = sadd.s32 %s40, 1
    %s42 = scalar_select %p39, %s40, %s41
    %p45 = pneg %p39
    %p46 = scmp.eq.s32.totalorder %s7, 1
    %p47 = por %p45, %p46
    %p48 = scmp.ne.s32.totalorder %s40, %s43
    %p49 = scmp.eq.s32.totalorder %s7, 0
    %p50 = por %p48, %p49
    %p51 = scmp.ne.s32.totalorder %s40, %s43
    %p52 = scmp.eq.s32.totalorder %s12, 1
    %p53 = por %p51, %p52
    %p54 = scmp.ne.s32.totalorder %s43, %s44
    %p55 = scmp.eq.s32.totalorder %s12, 0
    %p56 = por %p54, %p55
    %p57 = scmp.ne.s32.totalorder %s43, %s44
    %p58 = scmp.eq.s32.totalorder %s13, 1
    %p59 = por %p57, %p58
    %p61 = scmp.ne.s32.totalorder %s44, %s60
    %p62 = scmp.eq.s32.totalorder %s13, 0
    %p63 = por %p61, %p62
    %s64 = ssub.s32 %s14, %s33
    %s65 = ssub.s32 %s16, %s25
    %s66 = sor.u32 %s64, %s65
    %s67 = ssub.s32 %s15, %s29
    %s68 = sor.u32 %s66, %s67
    %p69 = scmp.eq.s32.totalorder %s68, 0
    %s71 = sadd.s32 %s70, 1
    %s72 = scalar_select %p69, %s70, %s71
    %p75 = pneg %p69
    %p76 = scmp.eq.s32.totalorder %s7, 1
    %p77 = por %p75, %p76
    %p78 = scmp.ne.s32.totalorder %s70, %s73
    %p79 = scmp.eq.s32.totalorder %s7, 0
    %p80 = por %p78, %p79
    %p81 = scmp.ne.s32.totalorder %s70, %s73
    %p82 = scmp.eq.s32.totalorder %s12, 1
    %p83 = por %p81, %p82
    %p84 = scmp.ne.s32.totalorder %s73, %s74
    %p85 = scmp.eq.s32.totalorder %s12, 0
    %p86 = por %p84, %p85
    %p87 = scmp.ne.s32.totalorder %s73, %s74
    %p88 = scmp.eq.s32.totalorder %s13, 1
    %p89 = por %p87, %p88
    %p91 = scmp.ne.s32.totalorder %s74, %s90
    %p92 = scmp.eq.s32.totalorder %s13, 0
    %p93 = por %p91, %p92
    %p94 = scmp.le.s32.totalorder 1, %s7
    %p95 = scmp.lt.s32.totalorder %s7, 3
    %p96 = pnand %p94, %p95
    %p97 = pneg %p96
    // Predicated region
    $region9: #{moving_avg.1} parent=5 // pred_check
      _
    $region10: #{moving_avg.1} parent=5 // pred_check_branch
      %99 = sbr.rel (%p96) target = $region12
    $region11: #{moving_avg.1} parent=5 // pred_region
      %s100 = ssub.s32 %s7, 1
    $region12: #{moving_avg.1} parent=5 // pred_fallthru
      _
    %p101 = scmp.lt.s32.totalorder %s7, 2
    // Predicated region
    $region13: #{moving_avg.1} parent=5 // pred_check
      %p102 = pneg %p101
    $region14: #{moving_avg.1} parent=5 // pred_check_branch
      %104 = sbr.rel (%p102) target = $region16
    $region15: #{moving_avg.1} parent=5 // pred_region
      // Predicated region
      $region17: #{moving_avg.1} parent=15 // pred_check
        %p105 = pneg %p50
      $region18: #{moving_avg.1} parent=15 // pred_check_branch
        %107 = sbr.rel (%p105) target = $region20
      $region19: #{moving_avg.1} parent=15 // pred_region
        %s108 = smul.u32 32, %s16
        %p109 = scmp.lt.s32.totalorder %s14, 1
        %s110 = scalar_select %p109, %s14, 1
        %p111 = scmp.lt.s32.totalorder %s108, 31
        %s112 = scalar_select %p111, %s108, 31
        %p113 = scmp.lt.s32.totalorder %s15, 0
        %s114 = scalar_select %p113, %s15, 0
        %s115 = sadd.s32 %s114, %s112
        %s116 = smul.addr %s110, 32
        %s117 = sadd.s32 %s115, %s116
        %s118 = smul.addr %s117, 8
        %s119 = scalar_lea.vmem %s0, %s118
        %s120 = smul.u32 32, %s16
      $region20: #{moving_avg.1} parent=15 // pred_fallthru
        _
    $region16: #{moving_avg.1} parent=5 // pred_fallthru
      _
    %p121 = scmp.le.s32.totalorder 1, %s7
    %p122 = scmp.lt.s32.totalorder %s7, 3
    %p123 = pnand %p121, %p122
    %p124 = pneg %p123
    // Predicated region
    $region21: #{moving_avg.1} parent=5 // pred_check
      _
    $region22: #{moving_avg.1} parent=5 // pred_check_branch
      %126 = sbr.rel (%p123) target = $region24
    $region23: #{moving_avg.1} parent=5 // pred_region
      %s127 = ssub.s32 %s7, 1
      %s128 = smul.u32 32, %s19
      %p129 = scmp.lt.s32.totalorder %s17, 1
      %s130 = scalar_select %p129, %s17, 1
      %p131 = scmp.lt.s32.totalorder %s128, 31
      %s132 = scalar_select %p131, %s128, 31
      %p133 = scmp.lt.s32.totalorder %s18, 0
      %s134 = scalar_select %p133, %s18, 0
      %s135 = sadd.s32 %s134, %s132
      %s136 = smul.addr %s130, 32
      %s137 = sadd.s32 %s135, %s136
      %s138 = smul.addr %s137, 8
      %s139 = scalar_lea.vmem %s0, %s138
      %p140 = pneg %p56
      %p141 = pneg %p53
      %p142 = pneg %p86
      %p143 = pneg %p83
      %s144 = smul.u32 32, %s19
      %p145 = scmp.lt.s32.totalorder %s17, 1
      %s146 = scalar_select %p145, %s17, 1
      %p147 = scmp.lt.s32.totalorder %s144, 31
      %s148 = scalar_select %p147, %s144, 31
      %p149 = scmp.lt.s32.totalorder %s18, 0
      %s150 = scalar_select %p149, %s18, 0
      %s151 = sadd.s32 %s150, %s148
      %s152 = smul.addr %s146, 32
      %s153 = sadd.s32 %s151, %s152
      %s154 = smul.addr %s153, 8
      %s155 = scalar_lea.vmem %s1, %s154
      %s156 = smul.u32 32, %s19
      %p157 = scmp.lt.s32.totalorder %s17, 1
      %s158 = scalar_select %p157, %s17, 1
      %p159 = scmp.lt.s32.totalorder %s156, 31
      %s160 = scalar_select %p159, %s156, 31
      %p161 = scmp.lt.s32.totalorder %s18, 0
      %s162 = scalar_select %p161, %s18, 0
      %s163 = sadd.s32 %s162, %s160
      %s164 = smul.addr %s158, 32
      %s165 = sadd.s32 %s163, %s164
      %s166 = smul.addr %s165, 8
      %s167 = scalar_lea.vmem %s0, %s166
      %s168 = smul.u32 32, %s19
      %s169 = smul.u32 32, %s19
      %p170 = scmp.lt.s32.totalorder %s17, 1
      %s171 = scalar_select %p170, %s17, 1
      %p172 = scmp.lt.s32.totalorder %s169, 31
      %s173 = scalar_select %p172, %s169, 31
      %p174 = scmp.lt.s32.totalorder %s18, 0
      %s175 = scalar_select %p174, %s18, 0
      %s176 = sadd.s32 %s175, %s173
      %s177 = smul.addr %s171, 32
      %s178 = sadd.s32 %s176, %s177
      %s179 = smul.addr %s178, 8
      %s180 = scalar_lea.vmem %s1, %s179
      %s181 = smul.u32 32, %s19
      %v182 = vld [vmem:[%s167] sm:$0x1]
      %v183 = vlaneseq
      %v184 = vshrl.u32 %v183, 7
      %v185 = vsub.s32 0, %v184
      %v186 = vrot.slane %v182, %v185
      %v187 = vld [vmem:[%s167] sm:$0xff]
      %v188 = vld [vmem:[%s167 + $0x8] sm:$0xff]
      %v189 = vld [vmem:[%s167 + $0x10] sm:$0xff]
      %v190 = vld [vmem:[%s167 + $0x18] sm:$0xff]
      %v191 = vld [vmem:[%s167 + $0x20] sm:$0xff]
      %v192 = vld [vmem:[%s167 + $0x28] sm:$0xff]
      %v193 = vld [vmem:[%s167 + $0x30] sm:$0xff]
      %v194 = vld [vmem:[%s167 + $0x38] sm:$0xff]
      %v195 = vld [vmem:[%s167 + $0x40] sm:$0xff]
      %v196 = vld [vmem:[%s167 + $0x48] sm:$0xff]
      %v197 = vld [vmem:[%s167 + $0x50] sm:$0xff]
      %v198 = vld [vmem:[%s167 + $0x58] sm:$0xff]
      %v199 = vld [vmem:[%s167 + $0x60] sm:$0xff]
      %v200 = vld [vmem:[%s167 + $0x68] sm:$0xff]
      %v201 = vld [vmem:[%s167 + $0x70] sm:$0xff]
      %v202 = vld [vmem:[%s167 + $0x78] sm:$0xff]
      %v203 = vld [vmem:[%s167 + $0x80] sm:$0xff]
      %v204 = vld [vmem:[%s167 + $0x88] sm:$0xff]
      %v205 = vld [vmem:[%s167 + $0x90] sm:$0xff]
      %v206 = vld [vmem:[%s167 + $0x98] sm:$0xff]
      %v207 = vld [vmem:[%s167 + $0xa0] sm:$0xff]
      %v208 = vld [vmem:[%s167 + $0xa8] sm:$0xff]
      %v209 = vld [vmem:[%s167 + $0xb0] sm:$0xff]
      %v210 = vld [vmem:[%s167 + $0xb8] sm:$0xff]
      %v211 = vld [vmem:[%s167 + $0xc0] sm:$0xff]
      %v212 = vld [vmem:[%s167 + $0xc8] sm:$0xff]
      %v213 = vld [vmem:[%s167 + $0xd0] sm:$0xff]
      %v214 = vld [vmem:[%s167 + $0xd8] sm:$0xff]
      %v215 = vld [vmem:[%s167 + $0xe0] sm:$0xff]
      %v216 = vld [vmem:[%s167 + $0xe8] sm:$0xff]
      %v217 = vld [vmem:[%s167 + $0xf0] sm:$0xff]
      %v218 = vld [vmem:[%s167 + $0xf8] sm:$0xff]
      %vm252 = vcmask 1046528
      %v253 = vrot.slane %v186, 1
      %v254 = vrot.slane %v187, 1
      %v255 = vsel %vm252, %v253, %v254
      %v256 = vrot.slane %v188, 1
      %v257 = vsel %vm252, %v254, %v256
      %v258 = vrot.slane %v189, 1
      %v259 = vsel %vm252, %v256, %v258
      %v260 = vrot.slane %v190, 1
      %v261 = vsel %vm252, %v258, %v260
      %v262 = vrot.slane %v191, 1
      %v263 = vsel %vm252, %v260, %v262
      %v264 = vrot.slane %v192, 1
      %v265 = vsel %vm252, %v262, %v264
      %v266 = vrot.slane %v193, 1
      %v267 = vsel %vm252, %v264, %v266
      %v268 = vrot.slane %v194, 1
      %v269 = vsel %vm252, %v266, %v268
      %v270 = vrot.slane %v195, 1
      %v271 = vsel %vm252, %v268, %v270
      %v272 = vrot.slane %v196, 1
      %v273 = vsel %vm252, %v270, %v272
      %v274 = vrot.slane %v197, 1
      %v275 = vsel %vm252, %v272, %v274
      %v276 = vrot.slane %v198, 1
      %v277 = vsel %vm252, %v274, %v276
      %v278 = vrot.slane %v199, 1
      %v279 = vsel %vm252, %v276, %v278
      %v280 = vrot.slane %v200, 1
      %v281 = vsel %vm252, %v278, %v280
      %v282 = vrot.slane %v201, 1
      %v283 = vsel %vm252, %v280, %v282
      %v284 = vrot.slane %v202, 1
      %v285 = vsel %vm252, %v282, %v284
      %v286 = vrot.slane %v203, 1
      %v287 = vsel %vm252, %v284, %v286
      %v288 = vrot.slane %v204, 1
      %v289 = vsel %vm252, %v286, %v288
      %v290 = vrot.slane %v205, 1
      %v291 = vsel %vm252, %v288, %v290
      %v292 = vrot.slane %v206, 1
      %v293 = vsel %vm252, %v290, %v292
      %v294 = vrot.slane %v207, 1
      %v295 = vsel %vm252, %v292, %v294
      %v296 = vrot.slane %v208, 1
      %v297 = vsel %vm252, %v294, %v296
      %v298 = vrot.slane %v209, 1
      %v299 = vsel %vm252, %v296, %v298
      %v300 = vrot.slane %v210, 1
      %v301 = vsel %vm252, %v298, %v300
      %v302 = vrot.slane %v211, 1
      %v303 = vsel %vm252, %v300, %v302
      %v304 = vrot.slane %v212, 1
      %v305 = vsel %vm252, %v302, %v304
      %v306 = vrot.slane %v213, 1
      %v307 = vsel %vm252, %v304, %v306
      %v308 = vrot.slane %v214, 1
      %v309 = vsel %vm252, %v306, %v308
      %v310 = vrot.slane %v215, 1
      %v311 = vsel %vm252, %v308, %v310
      %v312 = vrot.slane %v216, 1
      %v313 = vsel %vm252, %v310, %v312
      %v314 = vrot.slane %v217, 1
      %v315 = vsel %vm252, %v312, %v314
      %v316 = vrot.slane %v218, 1
      %v317 = vsel %vm252, %v314, %v316
      %v351 = vadd.f32 %v186, %v255
      %v352 = vadd.f32 %v187, %v257
      %v353 = vadd.f32 %v188, %v259
      %v354 = vadd.f32 %v189, %v261
      %v355 = vadd.f32 %v190, %v263
      %v356 = vadd.f32 %v191, %v265
      %v357 = vadd.f32 %v192, %v267
      %v358 = vadd.f32 %v193, %v269
      %v359 = vadd.f32 %v194, %v271
      %v360 = vadd.f32 %v195, %v273
      %v361 = vadd.f32 %v196, %v275
      %v362 = vadd.f32 %v197, %v277
      %v363 = vadd.f32 %v198, %v279
      %v364 = vadd.f32 %v199, %v281
      %v365 = vadd.f32 %v200, %v283
      %v366 = vadd.f32 %v201, %v285
      %v367 = vadd.f32 %v202, %v287
      %v368 = vadd.f32 %v203, %v289
      %v369 = vadd.f32 %v204, %v291
      %v370 = vadd.f32 %v205, %v293
      %v371 = vadd.f32 %v206, %v295
      %v372 = vadd.f32 %v207, %v297
      %v373 = vadd.f32 %v208, %v299
      %v374 = vadd.f32 %v209, %v301
      %v375 = vadd.f32 %v210, %v303
      %v376 = vadd.f32 %v211, %v305
      %v377 = vadd.f32 %v212, %v307
      %v378 = vadd.f32 %v213, %v309
      %v379 = vadd.f32 %v214, %v311
      %v380 = vadd.f32 %v215, %v313
      %v381 = vadd.f32 %v216, %v315
      %v382 = vadd.f32 %v217, %v317
      %v383 = vadd.f32 %v218, %v316
      %vm417 = vcmask 1045504
      %v418 = vrot.slane %v351, 2
      %v419 = vrot.slane %v352, 2
      %v420 = vsel %vm417, %v418, %v419
      %v421 = vrot.slane %v353, 2
      %v422 = vsel %vm417, %v419, %v421
      %v423 = vrot.slane %v354, 2
      %v424 = vsel %vm417, %v421, %v423
      %v425 = vrot.slane %v355, 2
      %v426 = vsel %vm417, %v423, %v425
      %v427 = vrot.slane %v356, 2
      %v428 = vsel %vm417, %v425, %v427
      %v429 = vrot.slane %v357, 2
      %v430 = vsel %vm417, %v427, %v429
      %v431 = vrot.slane %v358, 2
      %v432 = vsel %vm417, %v429, %v431
      %v433 = vrot.slane %v359, 2
      %v434 = vsel %vm417, %v431, %v433
      %v435 = vrot.slane %v360, 2
      %v436 = vsel %vm417, %v433, %v435
      %v437 = vrot.slane %v361, 2
      %v438 = vsel %vm417, %v435, %v437
      %v439 = vrot.slane %v362, 2
      %v440 = vsel %vm417, %v437, %v439
      %v441 = vrot.slane %v363, 2
      %v442 = vsel %vm417, %v439, %v441
      %v443 = vrot.slane %v364, 2
      %v444 = vsel %vm417, %v441, %v443
      %v445 = vrot.slane %v365, 2
      %v446 = vsel %vm417, %v443, %v445
      %v447 = vrot.slane %v366, 2
      %v448 = vsel %vm417, %v445, %v447
      %v449 = vrot.slane %v367, 2
      %v450 = vsel %vm417, %v447, %v449
      %v451 = vrot.slane %v368, 2
      %v452 = vsel %vm417, %v449, %v451
      %v453 = vrot.slane %v369, 2
      %v454 = vsel %vm417, %v451, %v453
      %v455 = vrot.slane %v370, 2
      %v456 = vsel %vm417, %v453, %v455
      %v457 = vrot.slane %v371, 2
      %v458 = vsel %vm417, %v455, %v457
      %v459 = vrot.slane %v372, 2
      %v460 = vsel %vm417, %v457, %v459
      %v461 = vrot.slane %v373, 2
      %v462 = vsel %vm417, %v459, %v461
      %v463 = vrot.slane %v374, 2
      %v464 = vsel %vm417, %v461, %v463
      %v465 = vrot.slane %v375, 2
      %v466 = vsel %vm417, %v463, %v465
      %v467 = vrot.slane %v376, 2
      %v468 = vsel %vm417, %v465, %v467
      %v469 = vrot.slane %v377, 2
      %v470 = vsel %vm417, %v467, %v469
      %v471 = vrot.slane %v378, 2
      %v472 = vsel %vm417, %v469, %v471
      %v473 = vrot.slane %v379, 2
      %v474 = vsel %vm417, %v471, %v473
      %v475 = vrot.slane %v380, 2
      %v476 = vsel %vm417, %v473, %v475
      %v477 = vrot.slane %v381, 2
      %v478 = vsel %vm417, %v475, %v477
      %v479 = vrot.slane %v382, 2
      %v480 = vsel %vm417, %v477, %v479
      %v481 = vrot.slane %v383, 2
      %v482 = vsel %vm417, %v479, %v481
      %v516 = vadd.f32 %v351, %v420
      %v517 = vadd.f32 %v352, %v422
      %v518 = vadd.f32 %v353, %v424
      %v519 = vadd.f32 %v354, %v426
      %v520 = vadd.f32 %v355, %v428
      %v521 = vadd.f32 %v356, %v430
      %v522 = vadd.f32 %v357, %v432
      %v523 = vadd.f32 %v358, %v434
      %v524 = vadd.f32 %v359, %v436
      %v525 = vadd.f32 %v360, %v438
      %v526 = vadd.f32 %v361, %v440
      %v527 = vadd.f32 %v362, %v442
      %v528 = vadd.f32 %v363, %v444
      %v529 = vadd.f32 %v364, %v446
      %v530 = vadd.f32 %v365, %v448
      %v531 = vadd.f32 %v366, %v450
      %v532 = vadd.f32 %v367, %v452
      %v533 = vadd.f32 %v368, %v454
      %v534 = vadd.f32 %v369, %v456
      %v535 = vadd.f32 %v370, %v458
      %v536 = vadd.f32 %v371, %v460
      %v537 = vadd.f32 %v372, %v462
      %v538 = vadd.f32 %v373, %v464
      %v539 = vadd.f32 %v374, %v466
      %v540 = vadd.f32 %v375, %v468
      %v541 = vadd.f32 %v376, %v470
      %v542 = vadd.f32 %v377, %v472
      %v543 = vadd.f32 %v378, %v474
      %v544 = vadd.f32 %v379, %v476
      %v545 = vadd.f32 %v380, %v478
      %v546 = vadd.f32 %v381, %v480
      %v547 = vadd.f32 %v382, %v482
      %v548 = vadd.f32 %v383, %v481
      %v582 = vrot.slane %v516, 1
      %v583 = vrot.slane %v517, 1
      %v584 = vsel %vm252, %v582, %v583
      %v585 = vrot.slane %v518, 1
      %v586 = vsel %vm252, %v583, %v585
      %v587 = vrot.slane %v519, 1
      %v588 = vsel %vm252, %v585, %v587
      %v589 = vrot.slane %v520, 1
      %v590 = vsel %vm252, %v587, %v589
      %v591 = vrot.slane %v521, 1
      %v592 = vsel %vm252, %v589, %v591
      %v593 = vrot.slane %v522, 1
      %v594 = vsel %vm252, %v591, %v593
      %v595 = vrot.slane %v523, 1
      %v596 = vsel %vm252, %v593, %v595
      %v597 = vrot.slane %v524, 1
      %v598 = vsel %vm252, %v595, %v597
      %v599 = vrot.slane %v525, 1
      %v600 = vsel %vm252, %v597, %v599
      %v601 = vrot.slane %v526, 1
      %v602 = vsel %vm252, %v599, %v601
      %v603 = vrot.slane %v527, 1
      %v604 = vsel %vm252, %v601, %v603
      %v605 = vrot.slane %v528, 1
      %v606 = vsel %vm252, %v603, %v605
      %v607 = vrot.slane %v529, 1
      %v608 = vsel %vm252, %v605, %v607
      %v609 = vrot.slane %v530, 1
      %v610 = vsel %vm252, %v607, %v609
      %v611 = vrot.slane %v531, 1
      %v612 = vsel %vm252, %v609, %v611
      %v613 = vrot.slane %v532, 1
      %v614 = vsel %vm252, %v611, %v613
      %v615 = vrot.slane %v533, 1
      %v616 = vsel %vm252, %v613, %v615
      %v617 = vrot.slane %v534, 1
      %v618 = vsel %vm252, %v615, %v617
      %v619 = vrot.slane %v535, 1
      %v620 = vsel %vm252, %v617, %v619
      %v621 = vrot.slane %v536, 1
      %v622 = vsel %vm252, %v619, %v621
      %v623 = vrot.slane %v537, 1
      %v624 = vsel %vm252, %v621, %v623
      %v625 = vrot.slane %v538, 1
      %v626 = vsel %vm252, %v623, %v625
      %v627 = vrot.slane %v539, 1
      %v628 = vsel %vm252, %v625, %v627
      %v629 = vrot.slane %v540, 1
      %v630 = vsel %vm252, %v627, %v629
      %v631 = vrot.slane %v541, 1
      %v632 = vsel %vm252, %v629, %v631
      %v633 = vrot.slane %v542, 1
      %v634 = vsel %vm252, %v631, %v633
      %v635 = vrot.slane %v543, 1
      %v636 = vsel %vm252, %v633, %v635
      %v637 = vrot.slane %v544, 1
      %v638 = vsel %vm252, %v635, %v637
      %v639 = vrot.slane %v545, 1
      %v640 = vsel %vm252, %v637, %v639
      %v641 = vrot.slane %v546, 1
      %v642 = vsel %vm252, %v639, %v641
      %v643 = vrot.slane %v547, 1
      %v644 = vsel %vm252, %v641, %v643
      %v645 = vrot.slane %v548, 1
      %v646 = vsel %vm252, %v643, %v645
      %v680 = vadd.f32 %v186, %v584
      %v681 = vadd.f32 %v187, %v586
      %v682 = vadd.f32 %v188, %v588
      %v683 = vadd.f32 %v189, %v590
      %v684 = vadd.f32 %v190, %v592
      %v685 = vadd.f32 %v191, %v594
      %v686 = vadd.f32 %v192, %v596
      %v687 = vadd.f32 %v193, %v598
      %v688 = vadd.f32 %v194, %v600
      %v689 = vadd.f32 %v195, %v602
      %v690 = vadd.f32 %v196, %v604
      %v691 = vadd.f32 %v197, %v606
      %v692 = vadd.f32 %v198, %v608
      %v693 = vadd.f32 %v199, %v610
      %v694 = vadd.f32 %v200, %v612
      %v695 = vadd.f32 %v201, %v614
      %v696 = vadd.f32 %v202, %v616
      %v697 = vadd.f32 %v203, %v618
      %v698 = vadd.f32 %v204, %v620
      %v699 = vadd.f32 %v205, %v622
      %v700 = vadd.f32 %v206, %v624
      %v701 = vadd.f32 %v207, %v626
      %v702 = vadd.f32 %v208, %v628
      %v703 = vadd.f32 %v209, %v630
      %v704 = vadd.f32 %v210, %v632
      %v705 = vadd.f32 %v211, %v634
      %v706 = vadd.f32 %v212, %v636
      %v707 = vadd.f32 %v213, %v638
      %v708 = vadd.f32 %v214, %v640
      %v709 = vadd.f32 %v215, %v642
      %v710 = vadd.f32 %v216, %v644
      %v711 = vadd.f32 %v217, %v646
      %v712 = vadd.f32 %v218, %v645
      %v713 = vmul.f32 %v680, 0.2
      %v714 = vmul.f32 %v681, 0.2
      %v715 = vmul.f32 %v682, 0.2
      %v716 = vmul.f32 %v683, 0.2
      %v717 = vmul.f32 %v684, 0.2
      %v718 = vmul.f32 %v685, 0.2
      %v719 = vmul.f32 %v686, 0.2
      %v720 = vmul.f32 %v687, 0.2
      %v721 = vmul.f32 %v688, 0.2
      %v722 = vmul.f32 %v689, 0.2
      %v723 = vmul.f32 %v690, 0.2
      %v724 = vmul.f32 %v691, 0.2
      %v725 = vmul.f32 %v692, 0.2
      %v726 = vmul.f32 %v693, 0.2
      %v727 = vmul.f32 %v694, 0.2
      %v728 = vmul.f32 %v695, 0.2
      %v729 = vmul.f32 %v696, 0.2
      %v730 = vmul.f32 %v697, 0.2
      %v731 = vmul.f32 %v698, 0.2
      %v732 = vmul.f32 %v699, 0.2
      %v733 = vmul.f32 %v700, 0.2
      %v734 = vmul.f32 %v701, 0.2
      %v735 = vmul.f32 %v702, 0.2
      %v736 = vmul.f32 %v703, 0.2
      %v737 = vmul.f32 %v704, 0.2
      %v738 = vmul.f32 %v705, 0.2
      %v739 = vmul.f32 %v706, 0.2
      %v740 = vmul.f32 %v707, 0.2
      %v741 = vmul.f32 %v708, 0.2
      %v742 = vmul.f32 %v709, 0.2
      %v743 = vmul.f32 %v710, 0.2
      %v744 = vmul.f32 %v711, 0.2
      %v745 = vmul.f32 %v712, 0.2
      %vm746 = vcmask 64516
      %747 = vst.msk [vmem:[%s180 - $0x4] sm:$0xf0] %vm746, %v713
      %vm748 = vcmask 64512
      %749 = vst.msk [vmem:[%s180 + $0x4] sm:$0xff] %vm748, %v714
      %750 = vst.msk [vmem:[%s180 + $0xc] sm:$0xff] %vm748, %v715
      %751 = vst.msk [vmem:[%s180 + $0x14] sm:$0xff] %vm748, %v716
      %752 = vst.msk [vmem:[%s180 + $0x1c] sm:$0xff] %vm748, %v717
      %753 = vst.msk [vmem:[%s180 + $0x24] sm:$0xff] %vm748, %v718
      %754 = vst.msk [vmem:[%s180 + $0x2c] sm:$0xff] %vm748, %v719
      %755 = vst.msk [vmem:[%s180 + $0x34] sm:$0xff] %vm748, %v720
      %756 = vst.msk [vmem:[%s180 + $0x3c] sm:$0xff] %vm748, %v721
      %757 = vst.msk [vmem:[%s180 + $0x44] sm:$0xff] %vm748, %v722
      %758 = vst.msk [vmem:[%s180 + $0x4c] sm:$0xff] %vm748, %v723
      %759 = vst.msk [vmem:[%s180 + $0x54] sm:$0xff] %vm748, %v724
      %760 = vst.msk [vmem:[%s180 + $0x5c] sm:$0xff] %vm748, %v725
      %761 = vst.msk [vmem:[%s180 + $0x64] sm:$0xff] %vm748, %v726
      %762 = vst.msk [vmem:[%s180 + $0x6c] sm:$0xff] %vm748, %v727
      %763 = vst.msk [vmem:[%s180 + $0x74] sm:$0xff] %vm748, %v728
      %764 = vst.msk [vmem:[%s180 + $0x7c] sm:$0xff] %vm748, %v729
      %765 = vst.msk [vmem:[%s180 + $0x84] sm:$0xff] %vm748, %v730
      %766 = vst.msk [vmem:[%s180 + $0x8c] sm:$0xff] %vm748, %v731
      %767 = vst.msk [vmem:[%s180 + $0x94] sm:$0xff] %vm748, %v732
      %768 = vst.msk [vmem:[%s180 + $0x9c] sm:$0xff] %vm748, %v733
      %769 = vst.msk [vmem:[%s180 + $0xa4] sm:$0xff] %vm748, %v734
      %770 = vst.msk [vmem:[%s180 + $0xac] sm:$0xff] %vm748, %v735
      %771 = vst.msk [vmem:[%s180 + $0xb4] sm:$0xff] %vm748, %v736
      %772 = vst.msk [vmem:[%s180 + $0xbc] sm:$0xff] %vm748, %v737
      %773 = vst.msk [vmem:[%s180 + $0xc4] sm:$0xff] %vm748, %v738
      %774 = vst.msk [vmem:[%s180 + $0xcc] sm:$0xff] %vm748, %v739
      %775 = vst.msk [vmem:[%s180 + $0xd4] sm:$0xff] %vm748, %v740
      %776 = vst.msk [vmem:[%s180 + $0xdc] sm:$0xff] %vm748, %v741
      %777 = vst.msk [vmem:[%s180 + $0xe4] sm:$0xff] %vm748, %v742
      %778 = vst.msk [vmem:[%s180 + $0xec] sm:$0xff] %vm748, %v743
      %779 = vst.msk [vmem:[%s180 + $0xf4] sm:$0xff] %vm748, %v744
      %vm780 = vcmask 60416
      %781 = vst.msk [vmem:[%s180 + $0xfc] sm:$0xf] %vm780, %v745
      %s782 = smul.u32 32, %s19
      %p783 = scmp.lt.s32.totalorder %s17, 1
      %s784 = scalar_select %p783, %s17, 1
      %p785 = scmp.lt.s32.totalorder %s782, 31
      %s786 = scalar_select %p785, %s782, 31
      %p787 = scmp.lt.s32.totalorder %s18, 0
      %s788 = scalar_select %p787, %s18, 0
      %s789 = sadd.s32 %s788, %s786
      %s790 = smul.addr %s784, 32
      %s791 = sadd.s32 %s789, %s790
      %s792 = smul.addr %s791, 8
      %s793 = scalar_lea.vmem %s1, %s792
      // Predicated region
      $region25: #{moving_avg.1} parent=23 // pred_check
        %p794 = pneg %p83
      $region26: #{moving_avg.1} parent=23 // pred_check_branch
        %796 = sbr.rel (%p794) target = $region28
      $region27: #{moving_avg.1} parent=23 // pred_region
        %s797 = smul.u32 32, %s19
      $region28: #{moving_avg.1} parent=23 // pred_fallthru
        _
    $region24: #{moving_avg.1} parent=5 // pred_fallthru
      _
    %p798 = scmp.le.s32.totalorder 2, %s7
    // Predicated region
    $region29: #{moving_avg.1} parent=5 // pred_check
      %p799 = pneg %p798
    $region30: #{moving_avg.1} parent=5 // pred_check_branch
      %801 = sbr.rel (%p799) target = $region32
    $region31: #{moving_avg.1} parent=5 // pred_region
      %s802 = ssub.s32 %s7, 2
      // Predicated region
      $region33: #{moving_avg.1} parent=31 // pred_check
        %p803 = pneg %p89
      $region34: #{moving_avg.1} parent=31 // pred_check_branch
        %805 = sbr.rel (%p803) target = $region36
      $region35: #{moving_avg.1} parent=31 // pred_region
        %s806 = smul.u32 32, %s22
        %p807 = scmp.lt.s32.totalorder %s20, 1
        %s808 = scalar_select %p807, %s20, 1
        %p809 = scmp.lt.s32.totalorder %s806, 31
        %s810 = scalar_select %p809, %s806, 31
        %p811 = scmp.lt.s32.totalorder %s21, 0
        %s812 = scalar_select %p811, %s21, 0
        %s813 = sadd.s32 %s812, %s810
        %s814 = smul.addr %s808, 32
        %s815 = sadd.s32 %s813, %s814
        %s816 = smul.addr %s815, 8
        %s817 = scalar_lea.vmem %s1, %s816
      $region36: #{moving_avg.1} parent=31 // pred_fallthru
        _
    $region32: #{moving_avg.1} parent=5 // pred_fallthru
      _
  $region6: #{moving_avg.1} parent=0 // loop_footer
    %s11 = sadd.s32 1, %s7
  $region7: #{moving_avg.1} parent=0 // loop_footer_branch
    %6 = sbr.rel target = $region3
  $region8: #{moving_avg.1} parent=0 // loop_exit
    _

</llo_original>
